<compile_context>
chip_gen: v6e
topology: v6e:2x2x1
jax: 0.10.0
libtpu: 0.0.40
codegen_flags: <defaults>
</compile_context>

<pallas_src>
import jax
import jax.numpy as jnp
from jax.experimental import pallas as pl
from jax.experimental.pallas import tpu as pltpu


def _lstm_proj_kernel(x_ref, wih_ref, whh_ref, b_ref, wp_ref, bp_ref, out_ref):
    T, TB, Ep = x_ref.shape
    H = whh_ref.shape[0]

    # ---- one-time loads (hoisted out of the recurrence) --------------------
    wih = wih_ref[...]        # (Ep, 4H)   gate cols ordered [i | f | o | g]
    whh = whh_ref[...]        # (H, 4H)    gate cols ordered [i | f | o | g]
    bias = b_ref[...]         # (1, 4H)    (b_ih + b_hh), same permutation

    # ---- input projection for ALL timesteps in ONE MXU matmul --------------
    # time-major: leading-axis reshapes only (TB % 8 == 0 -> no relayout)
    x2 = x_ref[...].reshape(T * TB, Ep)
    xp = jnp.dot(x2, wih, preferred_element_type=jnp.float32) + bias
    xp = xp.reshape(T, TB, 4 * H)            # (T, TB, 4H)

    # ---- serial recurrence: only h @ W_hh^T per step ------------------------
    # TODO(synk): for production T use lax.fori_loop + xp in VMEM scratch
    # (xp_ref[t]); full unroll is fine at T=8.
    # TODO(synk): keep W_hh^T staged in the MXU across the loop via
    # pltpu.matmul_push_rhs / matmul_acc_lhs / matmul_pop.
    h = jnp.zeros((TB, H), jnp.float32)
    c = jnp.zeros((TB, H), jnp.float32)
    for t in range(T):
        # xp[t] is a free leading-axis view (time-major layout)
        gates = xp[t] + jnp.dot(h, whh, preferred_element_type=jnp.float32)
        # sigmoid over the contiguous [i|f|o] block, tanh only over [g]
        sig = jax.nn.sigmoid(gates[:, : 3 * H])       # (TB, 3H)
        g_g = jnp.tanh(gates[:, 3 * H:])              # (TB, H)
        i_g = sig[:, 0 * H:1 * H]
        f_g = sig[:, 1 * H:2 * H]
        o_g = sig[:, 2 * H:3 * H]
        c = f_g * c + i_g * g_g
        h = o_g * jnp.tanh(c)

    # ---- projection + ReLU, written as a lane-dense (TB, Cp) slab ----------
    proj = jnp.dot(h, wp_ref[...], preferred_element_type=jnp.float32) + bp_ref[...]
    out_ref[...] = jnp.maximum(proj, 0.0)


def document_context_encoder(x_btE, kp):
    """x_btE: (B, T, E) zero-padded batch.  kp: prepped kernel params.  -> (B, C)."""
    B, T, E = x_btE.shape
    wih_t = kp["wih_t"]                      # (Ep, 4H)  E-padded, gate-permuted
    whh_t = kp["whh_t"]                      # (H, 4H)   gate-permuted
    bias = kp["bias"]                        # (1, 4H)   gate-permuted
    wp_t = kp["wp_t"]                        # (H, C)
    bp = kp["bp"]                            # (1, C)
    Ep = wih_t.shape[0]
    H = whh_t.shape[0]
    C = wp_t.shape[1]

    # sublane-align the batch, lane-densify x / output slab
    Bp = ((B + 7) // 8) * 8
    Cp = ((C + 127) // 128) * 128
    tb = min(Bp, 64)
    while Bp % tb:                           # batch tile that divides Bp
        tb -= 8

    x_p = jnp.pad(x_btE, ((0, Bp - B), (0, 0), (0, Ep - E)))
    x_tm = jnp.transpose(x_p, (1, 0, 2))     # time-major (T, Bp, Ep)
    wp_p = jnp.pad(wp_t, ((0, 0), (0, Cp - C)))
    bp_p = jnp.pad(bp, ((0, 0), (0, Cp - C)))

    out = pl.pallas_call(
        _lstm_proj_kernel,
        out_shape=jax.ShapeDtypeStruct((Bp, Cp), jnp.float32),
        grid=(Bp // tb,),
        in_specs=[
            pl.BlockSpec((T, tb, Ep), lambda i: (0, i, 0)),   # x (batch tile)
            pl.BlockSpec((Ep, 4 * H), lambda i: (0, 0)),      # W_ih^T (resident)
            pl.BlockSpec((H, 4 * H), lambda i: (0, 0)),       # W_hh^T (resident)
            pl.BlockSpec((1, 4 * H), lambda i: (0, 0)),       # bias
            pl.BlockSpec((H, Cp), lambda i: (0, 0)),          # W_proj^T (padded)
            pl.BlockSpec((1, Cp), lambda i: (0, 0)),          # b_proj   (padded)
        ],
        out_specs=pl.BlockSpec((tb, Cp), lambda i: (i, 0)),
        compiler_params=pltpu.CompilerParams(
            dimension_semantics=("parallel",)),
    )(x_tm, wih_t, whh_t, bias, wp_p, bp_p)

    return out[:B, :C]


document_context_encoder = jax.jit(document_context_encoder)


# ----------------------------- host-side helpers -----------------------------

def _permute_gate_cols(w_t, H):
    """Reorder the 4H gate axis from PyTorch [i|f|g|o] to [i|f|o|g]."""
    return jnp.concatenate(
        [w_t[..., : 2 * H], w_t[..., 3 * H: 4 * H], w_t[..., 2 * H: 3 * H]],
        axis=-1)


def _prep_kernel_params(raw):
    """PyTorch-layout weights -> kernel layout (transposed, permuted, E-padded)."""
    H = raw["whh"].shape[1]
    E = raw["wih"].shape[1]
    Ep = ((E + 127) // 128) * 128
    wih_t = _permute_gate_cols(raw["wih"].T, H)          # (E, 4H)
    wih_t = jnp.pad(wih_t, ((0, Ep - E), (0, 0)))        # (Ep, 4H) zero rows
    whh_t = _permute_gate_cols(raw["whh"].T, H)          # (H, 4H)
    bias = _permute_gate_cols(
        (raw["b_ih"] + raw["b_hh"]).reshape(1, -1), H)   # (1, 4H)
    return {
        "wih_t": wih_t,
        "whh_t": whh_t,
        "bias": bias,
        "wp_t": raw["wp"].T,                             # (H, C)
        "bp": raw["bp"].reshape(1, -1),                  # (1, C)
    }


def _init_params(key, embed_len, lstm_size, context_embed_len):
    """Deterministic PyTorch-style param init (uniform, 1/sqrt(H) scale)."""
    ks = jax.random.split(key, 6)
    s = 1.0 / jnp.sqrt(lstm_size)
    return {
        "wih": jax.random.uniform(ks[0], (4 * lstm_size, embed_len), jnp.float32, -s, s),
        "whh": jax.random.uniform(ks[1], (4 * lstm_size, lstm_size), jnp.float32, -s, s),
        "b_ih": jax.random.uniform(ks[2], (4 * lstm_size,), jnp.float32, -s, s),
        "b_hh": jax.random.uniform(ks[3], (4 * lstm_size,), jnp.float32, -s, s),
        "wp": jax.random.uniform(ks[4], (context_embed_len, lstm_size), jnp.float32, -s, s),
        "bp": jax.random.uniform(ks[5], (context_embed_len,), jnp.float32, -s, s),
    }


def _reference(x_btE, raw):
    """Pure-JAX reference (mirrors torch nn.LSTM + Linear + ReLU, gate order i,f,g,o)."""
    H = raw["whh"].shape[1]
    wih_t, whh_t = raw["wih"].T, raw["whh"].T
    bias = (raw["b_ih"] + raw["b_hh"]).reshape(1, -1)

    def step(carry, x_t):
        h, c = carry
        gates = x_t @ wih_t + h @ whh_t + bias
        i = jax.nn.sigmoid(gates[:, 0 * H:1 * H])
        f = jax.nn.sigmoid(gates[:, 1 * H:2 * H])
        g = jnp.tanh(gates[:, 2 * H:3 * H])
        o = jax.nn.sigmoid(gates[:, 3 * H:4 * H])
        c = f * c + i * g
        h = o * jnp.tanh(c)
        return (h, c), None

    B = x_btE.shape[0]
    h0 = jnp.zeros((B, H), jnp.float32)
    (hT, _), _ = jax.lax.scan(step, (h0, h0), jnp.transpose(x_btE, (1, 0, 2)))
    return jnp.maximum(hT @ raw["wp"].T + raw["bp"].reshape(1, -1), 0.0)


def _pad_batch(seqs, embed_len):
    """pad_batch equivalent: pad variable-length (L_i, E) seqs with zero vectors."""
    T = max(s.shape[0] for s in seqs)
    padded = [jnp.concatenate(
        [s, jnp.zeros((T - s.shape[0], embed_len), jnp.float32)], axis=0)
        for s in seqs]
    return jnp.stack(padded, axis=0)  # (B, T, E)


if __name__ == "__main__":
    embed_len = 32
    lstm_size = 32
    context_embed_len = 16
    B, T = 2, 8

    key = jax.random.PRNGKey(0)
    k_par, k_x0, k_x1 = jax.random.split(key, 3)
    raw = _init_params(k_par, embed_len, lstm_size, context_embed_len)
    kparams = _prep_kernel_params(raw)

    # variable-length entity_page_mentions, zero-padded to a common length
    seqs = [
        jax.random.normal(k_x0, (T, embed_len), jnp.float32),
        jax.random.normal(k_x1, (T - 3, embed_len), jnp.float32),
    ]
    x = _pad_batch(seqs, embed_len)  # (B, T, E)

    out = document_context_encoder(x, kparams)
    out = jax.block_until_ready(out)

    ref = _reference(x, raw)
    assert out.shape == (B, context_embed_len)
    assert jnp.allclose(out, ref, atol=1e-5, rtol=1e-5), "mismatch vs reference"

    print("KERNEL_OK")
</pallas_src>

<mosaic_0001>
module attributes {stable_mosaic.version = 11 : i64} {
  func.func @_lstm_proj_kernel(%arg0: i32, %arg1: memref<8x8x128xf32, #tpu.memory_space<vmem>>, %arg2: memref<128x128xf32, #tpu.memory_space<vmem>>, %arg3: memref<32x128xf32, #tpu.memory_space<vmem>>, %arg4: memref<1x128xf32, #tpu.memory_space<vmem>>, %arg5: memref<32x128xf32, #tpu.memory_space<vmem>>, %arg6: memref<1x128xf32, #tpu.memory_space<vmem>>, %arg7: memref<8x128xf32, #tpu.memory_space<vmem>>) attributes {dimension_semantics = [#tpu.dimension_semantics<parallel>], iteration_bounds = array<i64: 1>, scalar_prefetch = 0 : i64, scratch_operands = 0 : i64, tpu.core_type = #tpu.core_type<tc>, window_params = [{transform_indices = @transform_0, window_bounds = array<i64: 8, 8, 128>}, {pipeline_mode = #tpu.pipeline_mode<synchronous>, transform_indices = @transform_1, window_bounds = array<i64: 128, 128>}, {pipeline_mode = #tpu.pipeline_mode<synchronous>, transform_indices = @transform_2, window_bounds = array<i64: 32, 128>}, {pipeline_mode = #tpu.pipeline_mode<synchronous>, transform_indices = @transform_3, window_bounds = array<i64: 1, 128>}, {pipeline_mode = #tpu.pipeline_mode<synchronous>, transform_indices = @transform_4, window_bounds = array<i64: 32, 128>}, {pipeline_mode = #tpu.pipeline_mode<synchronous>, transform_indices = @transform_5, window_bounds = array<i64: 1, 128>}, {transform_indices = @transform_6, window_bounds = array<i64: 8, 128>}]} {
    %c0 = arith.constant 0 : index
    %c0_0 = arith.constant 0 : index
    %0 = vector.load %arg2[%c0, %c0_0] : memref<128x128xf32, #tpu.memory_space<vmem>>, vector<128x128xf32>
    %c0_1 = arith.constant 0 : index
    %c0_2 = arith.constant 0 : index
    %1 = vector.load %arg3[%c0_1, %c0_2] : memref<32x128xf32, #tpu.memory_space<vmem>>, vector<32x128xf32>
    %c0_3 = arith.constant 0 : index
    %c0_4 = arith.constant 0 : index
    %2 = vector.load %arg4[%c0_3, %c0_4] : memref<1x128xf32, #tpu.memory_space<vmem>>, vector<1x128xf32>
    %c0_5 = arith.constant 0 : index
    %c0_6 = arith.constant 0 : index
    %c0_7 = arith.constant 0 : index
    %3 = vector.load %arg1[%c0_5, %c0_6, %c0_7] : memref<8x8x128xf32, #tpu.memory_space<vmem>>, vector<8x8x128xf32>
    %4 = vector.shape_cast %3 : vector<8x8x128xf32> to vector<64x128xf32>
    %cst = arith.constant dense<0.000000e+00> : vector<64x128xf32>
    %5 = tpu.matmul %4, %0, %cst {dimension_numbers = #tpu.dot_dimension_numbers<[1], [0], [0], [1], [0, 0, 1, 1], [], []>} : vector<64x128xf32>, vector<128x128xf32>, vector<64x128xf32> -> vector<64x128xf32>
    %6 = vector.broadcast %2 : vector<1x128xf32> to vector<64x128xf32>
    %7 = arith.addf %5, %6 : vector<64x128xf32>
    %8 = vector.shape_cast %7 : vector<64x128xf32> to vector<8x8x128xf32>
    %cst_8 = arith.constant 0.000000e+00 : f32
    %9 = vector.broadcast %cst_8 : f32 to vector<8x32xf32>
    %cst_9 = arith.constant 0.000000e+00 : f32
    %10 = vector.broadcast %cst_9 : f32 to vector<8x32xf32>
    %11 = vector.extract_strided_slice %8 {offsets = [0, 0, 0], sizes = [1, 8, 128], strides = [1, 1, 1]} : vector<8x8x128xf32> to vector<1x8x128xf32>
    %12 = vector.shape_cast %11 : vector<1x8x128xf32> to vector<8x128xf32>
    %cst_10 = arith.constant dense<0.000000e+00> : vector<8x128xf32>
    %13 = tpu.matmul %9, %1, %cst_10 {dimension_numbers = #tpu.dot_dimension_numbers<[1], [0], [0], [1], [0, 0, 1, 1], [], []>} : vector<8x32xf32>, vector<32x128xf32>, vector<8x128xf32> -> vector<8x128xf32>
    %14 = arith.addf %12, %13 : vector<8x128xf32>
    %15 = vector.extract_strided_slice %14 {offsets = [0, 0], sizes = [8, 96], strides = [1, 1]} : vector<8x128xf32> to vector<8x96xf32>
    %16 = arith.negf %15 : vector<8x96xf32>
    %17 = math.exp %16 : vector<8x96xf32>
    %cst_11 = arith.constant 1.000000e+00 : f32
    %18 = vector.broadcast %cst_11 : f32 to vector<8x96xf32>
    %19 = arith.addf %18, %17 : vector<8x96xf32>
    %20 = arith.divf %18, %19 : vector<8x96xf32>
    %21 = vector.extract_strided_slice %14 {offsets = [0, 96], sizes = [8, 32], strides = [1, 1]} : vector<8x128xf32> to vector<8x32xf32>
    %22 = math.tanh %21 : vector<8x32xf32>
    %23 = vector.extract_strided_slice %20 {offsets = [0, 0], sizes = [8, 32], strides = [1, 1]} : vector<8x96xf32> to vector<8x32xf32>
    %24 = vector.extract_strided_slice %20 {offsets = [0, 32], sizes = [8, 32], strides = [1, 1]} : vector<8x96xf32> to vector<8x32xf32>
    %25 = vector.extract_strided_slice %20 {offsets = [0, 64], sizes = [8, 32], strides = [1, 1]} : vector<8x96xf32> to vector<8x32xf32>
    %26 = arith.mulf %24, %10 : vector<8x32xf32>
    %27 = arith.mulf %23, %22 : vector<8x32xf32>
    %28 = arith.addf %26, %27 : vector<8x32xf32>
    %29 = math.tanh %28 : vector<8x32xf32>
    %30 = arith.mulf %25, %29 : vector<8x32xf32>
    %31 = vector.extract_strided_slice %8 {offsets = [1, 0, 0], sizes = [1, 8, 128], strides = [1, 1, 1]} : vector<8x8x128xf32> to vector<1x8x128xf32>
    %32 = vector.shape_cast %31 : vector<1x8x128xf32> to vector<8x128xf32>
    %cst_12 = arith.constant dense<0.000000e+00> : vector<8x128xf32>
    %33 = tpu.matmul %30, %1, %cst_12 {dimension_numbers = #tpu.dot_dimension_numbers<[1], [0], [0], [1], [0, 0, 1, 1], [], []>} : vector<8x32xf32>, vector<32x128xf32>, vector<8x128xf32> -> vector<8x128xf32>
    %34 = arith.addf %32, %33 : vector<8x128xf32>
    %35 = vector.extract_strided_slice %34 {offsets = [0, 0], sizes = [8, 96], strides = [1, 1]} : vector<8x128xf32> to vector<8x96xf32>
    %36 = arith.negf %35 : vector<8x96xf32>
    %37 = math.exp %36 : vector<8x96xf32>
    %cst_13 = arith.constant 1.000000e+00 : f32
    %38 = vector.broadcast %cst_13 : f32 to vector<8x96xf32>
    %39 = arith.addf %38, %37 : vector<8x96xf32>
    %40 = arith.divf %38, %39 : vector<8x96xf32>
    %41 = vector.extract_strided_slice %34 {offsets = [0, 96], sizes = [8, 32], strides = [1, 1]} : vector<8x128xf32> to vector<8x32xf32>
    %42 = math.tanh %41 : vector<8x32xf32>
    %43 = vector.extract_strided_slice %40 {offsets = [0, 0], sizes = [8, 32], strides = [1, 1]} : vector<8x96xf32> to vector<8x32xf32>
    %44 = vector.extract_strided_slice %40 {offsets = [0, 32], sizes = [8, 32], strides = [1, 1]} : vector<8x96xf32> to vector<8x32xf32>
    %45 = vector.extract_strided_slice %40 {offsets = [0, 64], sizes = [8, 32], strides = [1, 1]} : vector<8x96xf32> to vector<8x32xf32>
    %46 = arith.mulf %44, %28 : vector<8x32xf32>
    %47 = arith.mulf %43, %42 : vector<8x32xf32>
    %48 = arith.addf %46, %47 : vector<8x32xf32>
    %49 = math.tanh %48 : vector<8x32xf32>
    %50 = arith.mulf %45, %49 : vector<8x32xf32>
    %51 = vector.extract_strided_slice %8 {offsets = [2, 0, 0], sizes = [1, 8, 128], strides = [1, 1, 1]} : vector<8x8x128xf32> to vector<1x8x128xf32>
    %52 = vector.shape_cast %51 : vector<1x8x128xf32> to vector<8x128xf32>
    %cst_14 = arith.constant dense<0.000000e+00> : vector<8x128xf32>
    %53 = tpu.matmul %50, %1, %cst_14 {dimension_numbers = #tpu.dot_dimension_numbers<[1], [0], [0], [1], [0, 0, 1, 1], [], []>} : vector<8x32xf32>, vector<32x128xf32>, vector<8x128xf32> -> vector<8x128xf32>
    %54 = arith.addf %52, %53 : vector<8x128xf32>
    %55 = vector.extract_strided_slice %54 {offsets = [0, 0], sizes = [8, 96], strides = [1, 1]} : vector<8x128xf32> to vector<8x96xf32>
    %56 = arith.negf %55 : vector<8x96xf32>
    %57 = math.exp %56 : vector<8x96xf32>
    %cst_15 = arith.constant 1.000000e+00 : f32
    %58 = vector.broadcast %cst_15 : f32 to vector<8x96xf32>
    %59 = arith.addf %58, %57 : vector<8x96xf32>
    %60 = arith.divf %58, %59 : vector<8x96xf32>
    %61 = vector.extract_strided_slice %54 {offsets = [0, 96], sizes = [8, 32], strides = [1, 1]} : vector<8x128xf32> to vector<8x32xf32>
    %62 = math.tanh %61 : vector<8x32xf32>
    %63 = vector.extract_strided_slice %60 {offsets = [0, 0], sizes = [8, 32], strides = [1, 1]} : vector<8x96xf32> to vector<8x32xf32>
    %64 = vector.extract_strided_slice %60 {offsets = [0, 32], sizes = [8, 32], strides = [1, 1]} : vector<8x96xf32> to vector<8x32xf32>
    %65 = vector.extract_strided_slice %60 {offsets = [0, 64], sizes = [8, 32], strides = [1, 1]} : vector<8x96xf32> to vector<8x32xf32>
    %66 = arith.mulf %64, %48 : vector<8x32xf32>
    %67 = arith.mulf %63, %62 : vector<8x32xf32>
    %68 = arith.addf %66, %67 : vector<8x32xf32>
    %69 = math.tanh %68 : vector<8x32xf32>
    %70 = arith.mulf %65, %69 : vector<8x32xf32>
    %71 = vector.extract_strided_slice %8 {offsets = [3, 0, 0], sizes = [1, 8, 128], strides = [1, 1, 1]} : vector<8x8x128xf32> to vector<1x8x128xf32>
    %72 = vector.shape_cast %71 : vector<1x8x128xf32> to vector<8x128xf32>
    %cst_16 = arith.constant dense<0.000000e+00> : vector<8x128xf32>
    %73 = tpu.matmul %70, %1, %cst_16 {dimension_numbers = #tpu.dot_dimension_numbers<[1], [0], [0], [1], [0, 0, 1, 1], [], []>} : vector<8x32xf32>, vector<32x128xf32>, vector<8x128xf32> -> vector<8x128xf32>
    %74 = arith.addf %72, %73 : vector<8x128xf32>
    %75 = vector.extract_strided_slice %74 {offsets = [0, 0], sizes = [8, 96], strides = [1, 1]} : vector<8x128xf32> to vector<8x96xf32>
    %76 = arith.negf %75 : vector<8x96xf32>
    %77 = math.exp %76 : vector<8x96xf32>
    %cst_17 = arith.constant 1.000000e+00 : f32
    %78 = vector.broadcast %cst_17 : f32 to vector<8x96xf32>
    %79 = arith.addf %78, %77 : vector<8x96xf32>
    %80 = arith.divf %78, %79 : vector<8x96xf32>
    %81 = vector.extract_strided_slice %74 {offsets = [0, 96], sizes = [8, 32], strides = [1, 1]} : vector<8x128xf32> to vector<8x32xf32>
    %82 = math.tanh %81 : vector<8x32xf32>
    %83 = vector.extract_strided_slice %80 {offsets = [0, 0], sizes = [8, 32], strides = [1, 1]} : vector<8x96xf32> to vector<8x32xf32>
    %84 = vector.extract_strided_slice %80 {offsets = [0, 32], sizes = [8, 32], strides = [1, 1]} : vector<8x96xf32> to vector<8x32xf32>
    %85 = vector.extract_strided_slice %80 {offsets = [0, 64], sizes = [8, 32], strides = [1, 1]} : vector<8x96xf32> to vector<8x32xf32>
    %86 = arith.mulf %84, %68 : vector<8x32xf32>
    %87 = arith.mulf %83, %82 : vector<8x32xf32>
    %88 = arith.addf %86, %87 : vector<8x32xf32>
    %89 = math.tanh %88 : vector<8x32xf32>
    %90 = arith.mulf %85, %89 : vector<8x32xf32>
    %91 = vector.extract_strided_slice %8 {offsets = [4, 0, 0], sizes = [1, 8, 128], strides = [1, 1, 1]} : vector<8x8x128xf32> to vector<1x8x128xf32>
    %92 = vector.shape_cast %91 : vector<1x8x128xf32> to vector<8x128xf32>
    %cst_18 = arith.constant dense<0.000000e+00> : vector<8x128xf32>
    %93 = tpu.matmul %90, %1, %cst_18 {dimension_numbers = #tpu.dot_dimension_numbers<[1], [0], [0], [1], [0, 0, 1, 1], [], []>} : vector<8x32xf32>, vector<32x128xf32>, vector<8x128xf32> -> vector<8x128xf32>
    %94 = arith.addf %92, %93 : vector<8x128xf32>
    %95 = vector.extract_strided_slice %94 {offsets = [0, 0], sizes = [8, 96], strides = [1, 1]} : vector<8x128xf32> to vector<8x96xf32>
    %96 = arith.negf %95 : vector<8x96xf32>
    %97 = math.exp %96 : vector<8x96xf32>
    %cst_19 = arith.constant 1.000000e+00 : f32
    %98 = vector.broadcast %cst_19 : f32 to vector<8x96xf32>
    %99 = arith.addf %98, %97 : vector<8x96xf32>
    %100 = arith.divf %98, %99 : vector<8x96xf32>
    %101 = vector.extract_strided_slice %94 {offsets = [0, 96], sizes = [8, 32], strides = [1, 1]} : vector<8x128xf32> to vector<8x32xf32>
    %102 = math.tanh %101 : vector<8x32xf32>
    %103 = vector.extract_strided_slice %100 {offsets = [0, 0], sizes = [8, 32], strides = [1, 1]} : vector<8x96xf32> to vector<8x32xf32>
    %104 = vector.extract_strided_slice %100 {offsets = [0, 32], sizes = [8, 32], strides = [1, 1]} : vector<8x96xf32> to vector<8x32xf32>
    %105 = vector.extract_strided_slice %100 {offsets = [0, 64], sizes = [8, 32], strides = [1, 1]} : vector<8x96xf32> to vector<8x32xf32>
    %106 = arith.mulf %104, %88 : vector<8x32xf32>
    %107 = arith.mulf %103, %102 : vector<8x32xf32>
    %108 = arith.addf %106, %107 : vector<8x32xf32>
    %109 = math.tanh %108 : vector<8x32xf32>
    %110 = arith.mulf %105, %109 : vector<8x32xf32>
    %111 = vector.extract_strided_slice %8 {offsets = [5, 0, 0], sizes = [1, 8, 128], strides = [1, 1, 1]} : vector<8x8x128xf32> to vector<1x8x128xf32>
    %112 = vector.shape_cast %111 : vector<1x8x128xf32> to vector<8x128xf32>
    %cst_20 = arith.constant dense<0.000000e+00> : vector<8x128xf32>
    %113 = tpu.matmul %110, %1, %cst_20 {dimension_numbers = #tpu.dot_dimension_numbers<[1], [0], [0], [1], [0, 0, 1, 1], [], []>} : vector<8x32xf32>, vector<32x128xf32>, vector<8x128xf32> -> vector<8x128xf32>
    %114 = arith.addf %112, %113 : vector<8x128xf32>
    %115 = vector.extract_strided_slice %114 {offsets = [0, 0], sizes = [8, 96], strides = [1, 1]} : vector<8x128xf32> to vector<8x96xf32>
    %116 = arith.negf %115 : vector<8x96xf32>
    %117 = math.exp %116 : vector<8x96xf32>
    %cst_21 = arith.constant 1.000000e+00 : f32
    %118 = vector.broadcast %cst_21 : f32 to vector<8x96xf32>
    %119 = arith.addf %118, %117 : vector<8x96xf32>
    %120 = arith.divf %118, %119 : vector<8x96xf32>
    %121 = vector.extract_strided_slice %114 {offsets = [0, 96], sizes = [8, 32], strides = [1, 1]} : vector<8x128xf32> to vector<8x32xf32>
    %122 = math.tanh %121 : vector<8x32xf32>
    %123 = vector.extract_strided_slice %120 {offsets = [0, 0], sizes = [8, 32], strides = [1, 1]} : vector<8x96xf32> to vector<8x32xf32>
    %124 = vector.extract_strided_slice %120 {offsets = [0, 32], sizes = [8, 32], strides = [1, 1]} : vector<8x96xf32> to vector<8x32xf32>
    %125 = vector.extract_strided_slice %120 {offsets = [0, 64], sizes = [8, 32], strides = [1, 1]} : vector<8x96xf32> to vector<8x32xf32>
    %126 = arith.mulf %124, %108 : vector<8x32xf32>
    %127 = arith.mulf %123, %122 : vector<8x32xf32>
    %128 = arith.addf %126, %127 : vector<8x32xf32>
    %129 = math.tanh %128 : vector<8x32xf32>
    %130 = arith.mulf %125, %129 : vector<8x32xf32>
    %131 = vector.extract_strided_slice %8 {offsets = [6, 0, 0], sizes = [1, 8, 128], strides = [1, 1, 1]} : vector<8x8x128xf32> to vector<1x8x128xf32>
    %132 = vector.shape_cast %131 : vector<1x8x128xf32> to vector<8x128xf32>
    %cst_22 = arith.constant dense<0.000000e+00> : vector<8x128xf32>
    %133 = tpu.matmul %130, %1, %cst_22 {dimension_numbers = #tpu.dot_dimension_numbers<[1], [0], [0], [1], [0, 0, 1, 1], [], []>} : vector<8x32xf32>, vector<32x128xf32>, vector<8x128xf32> -> vector<8x128xf32>
    %134 = arith.addf %132, %133 : vector<8x128xf32>
    %135 = vector.extract_strided_slice %134 {offsets = [0, 0], sizes = [8, 96], strides = [1, 1]} : vector<8x128xf32> to vector<8x96xf32>
    %136 = arith.negf %135 : vector<8x96xf32>
    %137 = math.exp %136 : vector<8x96xf32>
    %cst_23 = arith.constant 1.000000e+00 : f32
    %138 = vector.broadcast %cst_23 : f32 to vector<8x96xf32>
    %139 = arith.addf %138, %137 : vector<8x96xf32>
    %140 = arith.divf %138, %139 : vector<8x96xf32>
    %141 = vector.extract_strided_slice %134 {offsets = [0, 96], sizes = [8, 32], strides = [1, 1]} : vector<8x128xf32> to vector<8x32xf32>
    %142 = math.tanh %141 : vector<8x32xf32>
    %143 = vector.extract_strided_slice %140 {offsets = [0, 0], sizes = [8, 32], strides = [1, 1]} : vector<8x96xf32> to vector<8x32xf32>
    %144 = vector.extract_strided_slice %140 {offsets = [0, 32], sizes = [8, 32], strides = [1, 1]} : vector<8x96xf32> to vector<8x32xf32>
    %145 = vector.extract_strided_slice %140 {offsets = [0, 64], sizes = [8, 32], strides = [1, 1]} : vector<8x96xf32> to vector<8x32xf32>
    %146 = arith.mulf %144, %128 : vector<8x32xf32>
    %147 = arith.mulf %143, %142 : vector<8x32xf32>
    %148 = arith.addf %146, %147 : vector<8x32xf32>
    %149 = math.tanh %148 : vector<8x32xf32>
    %150 = arith.mulf %145, %149 : vector<8x32xf32>
    %151 = vector.extract_strided_slice %8 {offsets = [7, 0, 0], sizes = [1, 8, 128], strides = [1, 1, 1]} : vector<8x8x128xf32> to vector<1x8x128xf32>
    %152 = vector.shape_cast %151 : vector<1x8x128xf32> to vector<8x128xf32>
    %cst_24 = arith.constant dense<0.000000e+00> : vector<8x128xf32>
    %153 = tpu.matmul %150, %1, %cst_24 {dimension_numbers = #tpu.dot_dimension_numbers<[1], [0], [0], [1], [0, 0, 1, 1], [], []>} : vector<8x32xf32>, vector<32x128xf32>, vector<8x128xf32> -> vector<8x128xf32>
    %154 = arith.addf %152, %153 : vector<8x128xf32>
    %155 = vector.extract_strided_slice %154 {offsets = [0, 0], sizes = [8, 96], strides = [1, 1]} : vector<8x128xf32> to vector<8x96xf32>
    %156 = arith.negf %155 : vector<8x96xf32>
    %157 = math.exp %156 : vector<8x96xf32>
    %cst_25 = arith.constant 1.000000e+00 : f32
    %158 = vector.broadcast %cst_25 : f32 to vector<8x96xf32>
    %159 = arith.addf %158, %157 : vector<8x96xf32>
    %160 = arith.divf %158, %159 : vector<8x96xf32>
    %161 = vector.extract_strided_slice %154 {offsets = [0, 96], sizes = [8, 32], strides = [1, 1]} : vector<8x128xf32> to vector<8x32xf32>
    %162 = math.tanh %161 : vector<8x32xf32>
    %163 = vector.extract_strided_slice %160 {offsets = [0, 0], sizes = [8, 32], strides = [1, 1]} : vector<8x96xf32> to vector<8x32xf32>
    %164 = vector.extract_strided_slice %160 {offsets = [0, 32], sizes = [8, 32], strides = [1, 1]} : vector<8x96xf32> to vector<8x32xf32>
    %165 = vector.extract_strided_slice %160 {offsets = [0, 64], sizes = [8, 32], strides = [1, 1]} : vector<8x96xf32> to vector<8x32xf32>
    %166 = arith.mulf %164, %148 : vector<8x32xf32>
    %167 = arith.mulf %163, %162 : vector<8x32xf32>
    %168 = arith.addf %166, %167 : vector<8x32xf32>
    %169 = math.tanh %168 : vector<8x32xf32>
    %170 = arith.mulf %165, %169 : vector<8x32xf32>
    %c0_26 = arith.constant 0 : index
    %c0_27 = arith.constant 0 : index
    %171 = vector.load %arg5[%c0_26, %c0_27] : memref<32x128xf32, #tpu.memory_space<vmem>>, vector<32x128xf32>
    %cst_28 = arith.constant dense<0.000000e+00> : vector<8x128xf32>
    %172 = tpu.matmul %170, %171, %cst_28 {dimension_numbers = #tpu.dot_dimension_numbers<[1], [0], [0], [1], [0, 0, 1, 1], [], []>} : vector<8x32xf32>, vector<32x128xf32>, vector<8x128xf32> -> vector<8x128xf32>
    %c0_29 = arith.constant 0 : index
    %c0_30 = arith.constant 0 : index
    %173 = vector.load %arg6[%c0_29, %c0_30] : memref<1x128xf32, #tpu.memory_space<vmem>>, vector<1x128xf32>
    %174 = vector.broadcast %173 : vector<1x128xf32> to vector<8x128xf32>
    %175 = arith.addf %172, %174 : vector<8x128xf32>
    %cst_31 = arith.constant 0.000000e+00 : f32
    %176 = vector.broadcast %cst_31 : f32 to vector<8x128xf32>
    %177 = arith.maximumf %175, %176 : vector<8x128xf32>
    %c0_32 = arith.constant 0 : index
    %c0_33 = arith.constant 0 : index
    %178 = vector.load %arg7[%c0_32, %c0_33] : memref<8x128xf32, #tpu.memory_space<vmem>>, vector<8x128xf32>
    tpu.vector_store %arg7[%c0_32, %c0_33], %177 {strides = array<i32>} : memref<8x128xf32, #tpu.memory_space<vmem>>, vector<8x128xf32>,
    return
  }
  func.func @transform_0(%arg0: i32) -> (i32, i32, i32) {
    %c0_i32 = arith.constant 0 : i32
    %c0_i32_0 = arith.constant 0 : i32
    %c0_i32_1 = arith.constant 0 : i32
    return %c0_i32, %arg0, %c0_i32_0 : i32, i32, i32
  }
  func.func @transform_1(%arg0: i32) -> (i32, i32) {
    %c0_i32 = arith.constant 0 : i32
    %c0_i32_0 = arith.constant 0 : i32
    %c0_i32_1 = arith.constant 0 : i32
    return %c0_i32, %c0_i32_0 : i32, i32
  }
  func.func @transform_2(%arg0: i32) -> (i32, i32) {
    %c0_i32 = arith.constant 0 : i32
    %c0_i32_0 = arith.constant 0 : i32
    %c0_i32_1 = arith.constant 0 : i32
    return %c0_i32, %c0_i32_0 : i32, i32
  }
  func.func @transform_3(%arg0: i32) -> (i32, i32) {
    %c0_i32 = arith.constant 0 : i32
    %c0_i32_0 = arith.constant 0 : i32
    %c0_i32_1 = arith.constant 0 : i32
    return %c0_i32, %c0_i32_0 : i32, i32
  }
  func.func @transform_4(%arg0: i32) -> (i32, i32) {
    %c0_i32 = arith.constant 0 : i32
    %c0_i32_0 = arith.constant 0 : i32
    %c0_i32_1 = arith.constant 0 : i32
    return %c0_i32, %c0_i32_0 : i32, i32
  }
  func.func @transform_5(%arg0: i32) -> (i32, i32) {
    %c0_i32 = arith.constant 0 : i32
    %c0_i32_0 = arith.constant 0 : i32
    %c0_i32_1 = arith.constant 0 : i32
    return %c0_i32, %c0_i32_0 : i32, i32
  }
  func.func @transform_6(%arg0: i32) -> (i32, i32) {
    %c0_i32 = arith.constant 0 : i32
    %c0_i32_0 = arith.constant 0 : i32
    return %arg0, %c0_i32 : i32, i32
  }
}

</mosaic_0001>

<llo_original>
// kernel: document_context_encoder.1
$region0: #{document_context_encoder.1}
  #allocation0 [shape = 'u32[]', space=smem, size = 0x4, offset = 0x4, fixed_abs, tag = 'smem constant byte address 0x4 - core index']
  #allocation1 [shape = 'u32[144,128]{1,0:T(1,128)}', space=vmem, size = 0x12000, scoped, tag = 'internal scratch']
  %s0 = inlined_call_operand.vmem [shape: f32[8,8,128], index: 0, kind: input, shape index: {}]
  %s1 = inlined_call_operand.vmem [shape: f32[128,128], index: 1, kind: input, shape index: {}]
  %s2 = inlined_call_operand.vmem [shape: f32[32,128], index: 2, kind: input, shape index: {}]
  %s3 = inlined_call_operand.vmem [shape: f32[1,128], index: 3, kind: input, shape index: {}]
  %s4 = inlined_call_operand.vmem [shape: f32[32,128], index: 4, kind: input, shape index: {}]
  %s5 = inlined_call_operand.vmem [shape: f32[1,128], index: 5, kind: input, shape index: {}]
  %s6 = inlined_call_operand.vmem [shape: f32[8,128], index: 6, kind: output, shape index: {}]
  %s7 = sld [smem:[#allocation0]]
  $region34: #{document_context_encoder.1} parent=0
    _
  %s9 = ssub.s32 1, %s7
  %s10 = scalar_select 0, %s9, %s7
  // Predicated region
  $region2: #{document_context_encoder.1} parent=0 // pred_check
    _
  $region3: #{document_context_encoder.1} parent=0 // pred_check_branch
    %12 = sbr.rel (0) target = $region5
  $region4: #{document_context_encoder.1} parent=0 // pred_region
    _
  $region5: #{document_context_encoder.1} parent=0 // pred_fallthru
    _
  // Predicated region
  $region6: #{document_context_encoder.1} parent=0 // pred_check
    _
  $region7: #{document_context_encoder.1} parent=0 // pred_check_branch
    %14 = sbr.rel (0) target = $region9
  $region8: #{document_context_encoder.1} parent=0 // pred_region
    _
  $region9: #{document_context_encoder.1} parent=0 // pred_fallthru
    _
  // Predicated region
  $region10: #{document_context_encoder.1} parent=0 // pred_check
    _
  $region11: #{document_context_encoder.1} parent=0 // pred_check_branch
    %16 = sbr.rel (0) target = $region13
  $region12: #{document_context_encoder.1} parent=0 // pred_region
    _
  $region13: #{document_context_encoder.1} parent=0 // pred_fallthru
    _
  // Predicated region
  $region14: #{document_context_encoder.1} parent=0 // pred_check
    _
  $region15: #{document_context_encoder.1} parent=0 // pred_check_branch
    %18 = sbr.rel (0) target = $region17
  $region16: #{document_context_encoder.1} parent=0 // pred_region
    _
  $region17: #{document_context_encoder.1} parent=0 // pred_fallthru
    _
  // Predicated region
  $region18: #{document_context_encoder.1} parent=0 // pred_check
    _
  $region19: #{document_context_encoder.1} parent=0 // pred_check_branch
    %20 = sbr.rel (0) target = $region21
  $region20: #{document_context_encoder.1} parent=0 // pred_region
    _
  $region21: #{document_context_encoder.1} parent=0 // pred_fallthru
    _
  // Predicated region
  $region22: #{document_context_encoder.1} parent=0 // pred_check
    _
  $region23: #{document_context_encoder.1} parent=0 // pred_check_branch
    %22 = sbr.rel (0) target = $region25
  $region24: #{document_context_encoder.1} parent=0 // pred_region
    _
  $region25: #{document_context_encoder.1} parent=0 // pred_fallthru
    _
  %v23 = vld [vmem:[%s1] sm:$0xff]
  %v24 = vld [vmem:[%s1 + $0x8] sm:$0xff]
  %v25 = vld [vmem:[%s1 + $0x10] sm:$0xff]
  %v26 = vld [vmem:[%s1 + $0x18] sm:$0xff]
  %v27 = vld [vmem:[%s1 + $0x20] sm:$0xff]
  %v28 = vld [vmem:[%s1 + $0x28] sm:$0xff]
  %v29 = vld [vmem:[%s1 + $0x30] sm:$0xff]
  %v30 = vld [vmem:[%s1 + $0x38] sm:$0xff]
  %v31 = vld [vmem:[%s1 + $0x40] sm:$0xff]
  %v32 = vld [vmem:[%s1 + $0x48] sm:$0xff]
  %v33 = vld [vmem:[%s1 + $0x50] sm:$0xff]
  %v34 = vld [vmem:[%s1 + $0x58] sm:$0xff]
  %v35 = vld [vmem:[%s1 + $0x60] sm:$0xff]
  %v36 = vld [vmem:[%s1 + $0x68] sm:$0xff]
  %v37 = vld [vmem:[%s1 + $0x70] sm:$0xff]
  %v38 = vld [vmem:[%s1 + $0x78] sm:$0xff]
  %v39 = vld [vmem:[%s2] sm:$0xff]
  %v40 = vld [vmem:[%s2 + $0x8] sm:$0xff]
  %v41 = vld [vmem:[%s2 + $0x10] sm:$0xff]
  %v42 = vld [vmem:[%s2 + $0x18] sm:$0xff]
  %v43 = vld [vmem:[%s3] sm:$0x1]
  %v44 = vld [vmem:[%s0] sm:$0xff]
  %v45 = vld [vmem:[%s0 + $0x8] sm:$0xff]
  %v46 = vld [vmem:[%s0 + $0x10] sm:$0xff]
  %v47 = vld [vmem:[%s0 + $0x18] sm:$0xff]
  %v48 = vld [vmem:[%s0 + $0x20] sm:$0xff]
  %v49 = vld [vmem:[%s0 + $0x28] sm:$0xff]
  %v50 = vld [vmem:[%s0 + $0x30] sm:$0xff]
  %v51 = vld [vmem:[%s0 + $0x38] sm:$0xff]
  %v53 = vlaneseq
  %v54 = vshrl.u32 %v53, 7
  %v55 = vsub.s32 0, %v54
  %v56 = vrot.slane %v43, %v55
  %58 = vmatprep.subr.mxu0 0.0
  %59 = vmatpush1.msra.mxu0 %v38
  %60 = vmatprep.subr.mxu0 0.0
  %61 = vmatpush1.msra.mxu0 %v37
  %62 = vmatprep.subr.mxu0 0.0
  %63 = vmatpush1.msra.mxu0 %v36
  %64 = vmatprep.subr.mxu0 0.0
  %65 = vmatpush1.msra.mxu0 %v35
  %66 = vmatprep.subr.mxu0 0.0
  %67 = vmatpush1.msra.mxu0 %v34
  %68 = vmatprep.subr.mxu0 0.0
  %69 = vmatpush1.msra.mxu0 %v33
  %70 = vmatprep.subr.mxu0 0.0
  %71 = vmatpush1.msra.mxu0 %v32
  %72 = vmatprep.subr.mxu0 0.0
  %73 = vmatpush1.msra.mxu0 %v31
  %74 = vmatprep.subr.mxu0 0.0
  %75 = vmatpush1.msra.mxu0 %v30
  %76 = vmatprep.subr.mxu0 0.0
  %77 = vmatpush1.msra.mxu0 %v29
  %78 = vmatprep.subr.mxu0 0.0
  %79 = vmatpush1.msra.mxu0 %v28
  %80 = vmatprep.subr.mxu0 0.0
  %81 = vmatpush1.msra.mxu0 %v27
  %82 = vmatprep.subr.mxu0 0.0
  %83 = vmatpush1.msra.mxu0 %v26
  %84 = vmatprep.subr.mxu0 0.0
  %85 = vmatpush1.msra.mxu0 %v25
  %86 = vmatprep.subr.mxu0 0.0
  %87 = vmatpush1.msra.mxu0 %v24
  %88 = vmatprep.subr.mxu0 0.0
  %89 = vmatpush1.msra.mxu0 %v23
  %90 = vmatprep.subr.mxu0 0.0
  %91 = vmatpush2.msra.mxu0 0.0
  %92 = vmatprep.subr.mxu0 0.0
  %93 = vmatpush2.msra.mxu0 0.0
  %94 = vmatprep.subr.mxu0 0.0
  %95 = vmatpush2.msra.mxu0 0.0
  %96 = vmatprep.subr.mxu0 0.0
  %97 = vmatpush2.msra.mxu0 0.0
  %98 = vmatprep.subr.mxu0 0.0
  %99 = vmatpush2.msra.mxu0 0.0
  %100 = vmatprep.subr.mxu0 0.0
  %101 = vmatpush2.msra.mxu0 0.0
  %102 = vmatprep.subr.mxu0 0.0
  %103 = vmatpush2.msra.mxu0 0.0
  %104 = vmatprep.subr.mxu0 0.0
  %105 = vmatpush2.msra.mxu0 0.0
  %106 = vmatprep.subr.mxu0 0.0
  %107 = vmatpush2.msra.mxu0 0.0
  %108 = vmatprep.subr.mxu0 0.0
  %109 = vmatpush2.msra.mxu0 0.0
  %110 = vmatprep.subr.mxu0 0.0
  %111 = vmatpush2.msra.mxu0 0.0
  %112 = vmatprep.subr.mxu0 0.0
  %113 = vmatpush2.msra.mxu0 0.0
  %114 = vmatprep.subr.mxu0 0.0
  %115 = vmatpush2.msra.mxu0 0.0
  %116 = vmatprep.subr.mxu0 0.0
  %117 = vmatpush2.msra.mxu0 0.0
  %118 = vmatprep.subr.mxu0 0.0
  %119 = vmatpush2.msra.mxu0 0.0
  %120 = vmatprep.subr.mxu0 0.0
  %121 = vmatpush2.msra.mxu0 0.0
  %122 = vmatprep.mubr.f32.mxu0 0.0
  %123 = vmatmul.mubr.f32.gmra.mxu0 %v44
  %v124 = vpop.f32.mrf.mxu0
  %v125 = vadd.f32 %v56, %v124
  %v126 = vpop.f32.mrf.mxu0
  %127 = vmatprep.mubr.f32.mxu0 0.0
  %128 = vmatmul.mubr.f32.gmra.mxu0 %v45
  %v129 = vpop.f32.mrf.mxu0
  %v130 = vadd.f32 %v56, %v129
  %v131 = vpop.f32.mrf.mxu0
  %132 = vmatprep.mubr.f32.mxu0 0.0
  %133 = vmatmul.mubr.f32.gmra.mxu0 %v46
  %v134 = vpop.f32.mrf.mxu0
  %v135 = vadd.f32 %v56, %v134
  %v136 = vpop.f32.mrf.mxu0
  %137 = vmatprep.mubr.f32.mxu0 0.0
  %138 = vmatmul.mubr.f32.gmra.mxu0 %v47
  %v139 = vpop.f32.mrf.mxu0
  %v140 = vadd.f32 %v56, %v139
  %v141 = vpop.f32.mrf.mxu0
  %142 = vmatprep.mubr.f32.mxu0 0.0
  %143 = vmatmul.mubr.f32.gmra.mxu0 %v48
  %v144 = vpop.f32.mrf.mxu0
  %v145 = vadd.f32 %v56, %v144
  %v146 = vpop.f32.mrf.mxu0
  %147 = vmatprep.mubr.f32.mxu0 0.0
  %148 = vmatmul.mubr.f32.gmra.mxu0 %v49
  %v149 = vpop.f32.mrf.mxu0
  %v150 = vadd.f32 %v56, %v149
  %v151 = vpop.f32.mrf.mxu0
  %152 = vmatprep.mubr.f32.mxu0 0.0
  %153 = vmatmul.mubr.f32.gmra.mxu0 %v50
  %v154 = vpop.f32.mrf.mxu0
  %v155 = vadd.f32 %v56, %v154
  %v156 = vpop.f32.mrf.mxu0
  %157 = vmatprep.mubr.f32.mxu0 0.0
  %158 = vmatmul.mubr.f32.gmra.mxu0 %v51
  %v159 = vpop.f32.mrf.mxu0
  %v160 = vadd.f32 %v56, %v159
  %v161 = vpop.f32.mrf.mxu0
  %162 = vdwg.mxu0
  %vm163 = vcmask 261120
  %v165 = vsel %vm163, 0.0, 0
  %167 = vmatprep.subr.mxu0 0.0
  %168 = vmatpush1.msra.mxu0 0.0
  %169 = vmatprep.subr.mxu0 0.0
  %170 = vmatpush1.msra.mxu0 0.0
  %171 = vmatprep.subr.mxu0 0.0
  %172 = vmatpush1.msra.mxu0 0.0
  %173 = vmatprep.subr.mxu0 0.0
  %174 = vmatpush1.msra.mxu0 0.0
  %175 = vmatprep.subr.mxu0 0.0
  %176 = vmatpush1.msra.mxu0 0.0
  %177 = vmatprep.subr.mxu0 0.0
  %178 = vmatpush1.msra.mxu0 0.0
  %179 = vmatprep.subr.mxu0 0.0
  %180 = vmatpush1.msra.mxu0 0.0
  %181 = vmatprep.subr.mxu0 0.0
  %182 = vmatpush1.msra.mxu0 0.0
  %183 = vmatprep.subr.mxu0 0.0
  %184 = vmatpush1.msra.mxu0 0.0
  %185 = vmatprep.subr.mxu0 0.0
  %186 = vmatpush1.msra.mxu0 0.0
  %187 = vmatprep.subr.mxu0 0.0
  %188 = vmatpush1.msra.mxu0 0.0
  %189 = vmatprep.subr.mxu0 0.0
  %190 = vmatpush1.msra.mxu0 0.0
  %191 = vmatprep.subr.mxu0 0.0
  %192 = vmatpush1.msra.mxu0 %v42
  %193 = vmatprep.subr.mxu0 0.0
  %194 = vmatpush1.msra.mxu0 %v41
  %195 = vmatprep.subr.mxu0 0.0
  %196 = vmatpush1.msra.mxu0 %v40
  %197 = vmatprep.subr.mxu0 0.0
  %198 = vmatpush1.msra.mxu0 %v39
  %199 = vmatprep.subr.mxu0 0.0
  %200 = vmatpush2.msra.mxu0 0.0
  %201 = vmatprep.subr.mxu0 0.0
  %202 = vmatpush2.msra.mxu0 0.0
  %203 = vmatprep.subr.mxu0 0.0
  %204 = vmatpush2.msra.mxu0 0.0
  %205 = vmatprep.subr.mxu0 0.0
  %206 = vmatpush2.msra.mxu0 0.0
  %207 = vmatprep.subr.mxu0 0.0
  %208 = vmatpush2.msra.mxu0 0.0
  %209 = vmatprep.subr.mxu0 0.0
  %210 = vmatpush2.msra.mxu0 0.0
  %211 = vmatprep.subr.mxu0 0.0
  %212 = vmatpush2.msra.mxu0 0.0
  %213 = vmatprep.subr.mxu0 0.0
  %214 = vmatpush2.msra.mxu0 0.0
  %215 = vmatprep.subr.mxu0 0.0
  %216 = vmatpush2.msra.mxu0 0.0
  %217 = vmatprep.subr.mxu0 0.0
  %218 = vmatpush2.msra.mxu0 0.0
  %219 = vmatprep.subr.mxu0 0.0
  %220 = vmatpush2.msra.mxu0 0.0
  %221 = vmatprep.subr.mxu0 0.0
  %222 = vmatpush2.msra.mxu0 0.0
  %223 = vmatprep.subr.mxu0 0.0
  %224 = vmatpush2.msra.mxu0 0.0
  %225 = vmatprep.subr.mxu0 0.0
  %226 = vmatpush2.msra.mxu0 0.0
  %227 = vmatprep.subr.mxu0 0.0
  %228 = vmatpush2.msra.mxu0 0.0
  %229 = vmatprep.subr.mxu0 0.0
  %230 = vmatpush2.msra.mxu0 0.0
  %231 = vmatprep.mubr.f32.mxu0 0.0
  %232 = vmatmul.mubr.f32.gmra.mxu0 %v165
  %v233 = vpop.f32.mrf.mxu0
  %v234 = vadd.f32 0.0, %v233
  %v235 = vpop.f32.mrf.mxu0
  %236 = vdwg.mxu0
  %v237 = vadd.f32 %v125, %v234
  %v238 = vxor.u32 %v237, 2147483648
  %v239 = vmul.f32 %v238, 1.442695
  %v240 = vpow.pop %v239
  %v241 = vadd.f32 %v240, 1.0
  %v242 = vrcp.pop %v241
  %v243 = vmul.f32 1.0, %v242
  %v244 = vtanh.pop %v237
  %v245 = vmul.f32 %v243, 0.0
  %247 = vrot.lane.b32.xlu0 %v244, 32
  %v248 = vpop.permute.xlu0 %247
  %v250 = vmul.f32 %v243, %v248
  %252 = vrot.lane.b32.xlu0 %v250, 32
  %v253 = vpop.permute.xlu0 %252
  %v255 = vadd.f32 %v245, %v253
  %v256 = vtanh.pop %v255
  %258 = vrot.lane.b32.xlu0 %v256, 32
  %v259 = vpop.permute.xlu0 %258
  %v261 = vmul.f32 %v243, %v259
  %263 = vrot.lane.b32.xlu0 %v261, 64
  %v264 = vpop.permute.xlu0 %263
  %v265 = vsel %vm163, %v264, 0
  %267 = vmatprep.subr.mxu0 0.0
  %268 = vmatpush1.msra.mxu0 0.0
  %269 = vmatprep.subr.mxu0 0.0
  %270 = vmatpush1.msra.mxu0 0.0
  %271 = vmatprep.subr.mxu0 0.0
  %272 = vmatpush1.msra.mxu0 0.0
  %273 = vmatprep.subr.mxu0 0.0
  %274 = vmatpush1.msra.mxu0 0.0
  %275 = vmatprep.subr.mxu0 0.0
  %276 = vmatpush1.msra.mxu0 0.0
  %277 = vmatprep.subr.mxu0 0.0
  %278 = vmatpush1.msra.mxu0 0.0
  %279 = vmatprep.subr.mxu0 0.0
  %280 = vmatpush1.msra.mxu0 0.0
  %281 = vmatprep.subr.mxu0 0.0
  %282 = vmatpush1.msra.mxu0 0.0
  %283 = vmatprep.subr.mxu0 0.0
  %284 = vmatpush1.msra.mxu0 0.0
  %285 = vmatprep.subr.mxu0 0.0
  %286 = vmatpush1.msra.mxu0 0.0
  %287 = vmatprep.subr.mxu0 0.0
  %288 = vmatpush1.msra.mxu0 0.0
  %289 = vmatprep.subr.mxu0 0.0
  %290 = vmatpush1.msra.mxu0 0.0
  %291 = vmatprep.subr.mxu0 0.0
  %292 = vmatpush1.msra.mxu0 %v42
  %293 = vmatprep.subr.mxu0 0.0
  %294 = vmatpush1.msra.mxu0 %v41
  %295 = vmatprep.subr.mxu0 0.0
  %296 = vmatpush1.msra.mxu0 %v40
  %297 = vmatprep.subr.mxu0 0.0
  %298 = vmatpush1.msra.mxu0 %v39
  %299 = vmatprep.subr.mxu0 0.0
  %300 = vmatpush2.msra.mxu0 0.0
  %301 = vmatprep.subr.mxu0 0.0
  %302 = vmatpush2.msra.mxu0 0.0
  %303 = vmatprep.subr.mxu0 0.0
  %304 = vmatpush2.msra.mxu0 0.0
  %305 = vmatprep.subr.mxu0 0.0
  %306 = vmatpush2.msra.mxu0 0.0
  %307 = vmatprep.subr.mxu0 0.0
  %308 = vmatpush2.msra.mxu0 0.0
  %309 = vmatprep.subr.mxu0 0.0
  %310 = vmatpush2.msra.mxu0 0.0
  %311 = vmatprep.subr.mxu0 0.0
  %312 = vmatpush2.msra.mxu0 0.0
  %313 = vmatprep.subr.mxu0 0.0
  %314 = vmatpush2.msra.mxu0 0.0
  %315 = vmatprep.subr.mxu0 0.0
  %316 = vmatpush2.msra.mxu0 0.0
  %317 = vmatprep.subr.mxu0 0.0
  %318 = vmatpush2.msra.mxu0 0.0
  %319 = vmatprep.subr.mxu0 0.0
  %320 = vmatpush2.msra.mxu0 0.0
  %321 = vmatprep.subr.mxu0 0.0
  %322 = vmatpush2.msra.mxu0 0.0
  %323 = vmatprep.subr.mxu0 0.0
  %324 = vmatpush2.msra.mxu0 0.0
  %325 = vmatprep.subr.mxu0 0.0
  %326 = vmatpush2.msra.mxu0 0.0
  %327 = vmatprep.subr.mxu0 0.0
  %328 = vmatpush2.msra.mxu0 0.0
  %329 = vmatprep.subr.mxu0 0.0
  %330 = vmatpush2.msra.mxu0 0.0
  %331 = vmatprep.mubr.f32.mxu0 0.0
  %332 = vmatmul.mubr.f32.gmra.mxu0 %v265
  %v333 = vpop.f32.mrf.mxu0
  %v334 = vadd.f32 0.0, %v333
  %v335 = vpop.f32.mrf.mxu0
  %336 = vdwg.mxu0
  %v337 = vadd.f32 %v130, %v334
  %v338 = vxor.u32 %v337, 2147483648
  %v339 = vmul.f32 %v338, 1.442695
  %v340 = vpow.pop %v339
  %v341 = vadd.f32 %v340, 1.0
  %v342 = vrcp.pop %v341
  %v343 = vmul.f32 1.0, %v342
  %v344 = vtanh.pop %v337
  %v345 = vmul.f32 %v343, %v255
  %347 = vrot.lane.b32.xlu0 %v344, 32
  %v348 = vpop.permute.xlu0 %347
  %v350 = vmul.f32 %v343, %v348
  %352 = vrot.lane.b32.xlu0 %v350, 32
  %v353 = vpop.permute.xlu0 %352
  %v355 = vadd.f32 %v345, %v353
  %v356 = vtanh.pop %v355
  %358 = vrot.lane.b32.xlu0 %v356, 32
  %v359 = vpop.permute.xlu0 %358
  %v361 = vmul.f32 %v343, %v359
  %363 = vrot.lane.b32.xlu0 %v361, 64
  %v364 = vpop.permute.xlu0 %363
  %v365 = vsel %vm163, %v364, 0
  %367 = vmatprep.subr.mxu0 0.0
  %368 = vmatpush1.msra.mxu0 0.0
  %369 = vmatprep.subr.mxu0 0.0
  %370 = vmatpush1.msra.mxu0 0.0
  %371 = vmatprep.subr.mxu0 0.0
  %372 = vmatpush1.msra.mxu0 0.0
  %373 = vmatprep.subr.mxu0 0.0
  %374 = vmatpush1.msra.mxu0 0.0
  %375 = vmatprep.subr.mxu0 0.0
  %376 = vmatpush1.msra.mxu0 0.0
  %377 = vmatprep.subr.mxu0 0.0
  %378 = vmatpush1.msra.mxu0 0.0
  %379 = vmatprep.subr.mxu0 0.0
  %380 = vmatpush1.msra.mxu0 0.0
  %381 = vmatprep.subr.mxu0 0.0
  %382 = vmatpush1.msra.mxu0 0.0
  %383 = vmatprep.subr.mxu0 0.0
  %384 = vmatpush1.msra.mxu0 0.0
  %385 = vmatprep.subr.mxu0 0.0
  %386 = vmatpush1.msra.mxu0 0.0
  %387 = vmatprep.subr.mxu0 0.0
  %388 = vmatpush1.msra.mxu0 0.0
  %389 = vmatprep.subr.mxu0 0.0
  %390 = vmatpush1.msra.mxu0 0.0
  %391 = vmatprep.subr.mxu0 0.0
  %392 = vmatpush1.msra.mxu0 %v42
  %393 = vmatprep.subr.mxu0 0.0
  %394 = vmatpush1.msra.mxu0 %v41
  %395 = vmatprep.subr.mxu0 0.0
  %396 = vmatpush1.msra.mxu0 %v40
  %397 = vmatprep.subr.mxu0 0.0
  %398 = vmatpush1.msra.mxu0 %v39
  %399 = vmatprep.subr.mxu0 0.0
  %400 = vmatpush2.msra.mxu0 0.0
  %401 = vmatprep.subr.mxu0 0.0
  %402 = vmatpush2.msra.mxu0 0.0
  %403 = vmatprep.subr.mxu0 0.0
  %404 = vmatpush2.msra.mxu0 0.0
  %405 = vmatprep.subr.mxu0 0.0
  %406 = vmatpush2.msra.mxu0 0.0
  %407 = vmatprep.subr.mxu0 0.0
  %408 = vmatpush2.msra.mxu0 0.0
  %409 = vmatprep.subr.mxu0 0.0
  %410 = vmatpush2.msra.mxu0 0.0
  %411 = vmatprep.subr.mxu0 0.0
  %412 = vmatpush2.msra.mxu0 0.0
  %413 = vmatprep.subr.mxu0 0.0
  %414 = vmatpush2.msra.mxu0 0.0
  %415 = vmatprep.subr.mxu0 0.0
  %416 = vmatpush2.msra.mxu0 0.0
  %417 = vmatprep.subr.mxu0 0.0
  %418 = vmatpush2.msra.mxu0 0.0
  %419 = vmatprep.subr.mxu0 0.0
  %420 = vmatpush2.msra.mxu0 0.0
  %421 = vmatprep.subr.mxu0 0.0
  %422 = vmatpush2.msra.mxu0 0.0
  %423 = vmatprep.subr.mxu0 0.0
  %424 = vmatpush2.msra.mxu0 0.0
  %425 = vmatprep.subr.mxu0 0.0
  %426 = vmatpush2.msra.mxu0 0.0
  %427 = vmatprep.subr.mxu0 0.0
  %428 = vmatpush2.msra.mxu0 0.0
  %429 = vmatprep.subr.mxu0 0.0
  %430 = vmatpush2.msra.mxu0 0.0
  %431 = vmatprep.mubr.f32.mxu0 0.0
  %432 = vmatmul.mubr.f32.gmra.mxu0 %v365
  %v433 = vpop.f32.mrf.mxu0
  %v434 = vadd.f32 0.0, %v433
  %v435 = vpop.f32.mrf.mxu0
  %436 = vdwg.mxu0
  %v437 = vadd.f32 %v135, %v434
  %v438 = vxor.u32 %v437, 2147483648
  %v439 = vmul.f32 %v438, 1.442695
  %v440 = vpow.pop %v439
  %v441 = vadd.f32 %v440, 1.0
  %v442 = vrcp.pop %v441
  %v443 = vmul.f32 1.0, %v442
  %v444 = vtanh.pop %v437
  %v445 = vmul.f32 %v443, %v355
  %447 = vrot.lane.b32.xlu0 %v444, 32
  %v448 = vpop.permute.xlu0 %447
  %v450 = vmul.f32 %v443, %v448
  %452 = vrot.lane.b32.xlu0 %v450, 32
  %v453 = vpop.permute.xlu0 %452
  %v455 = vadd.f32 %v445, %v453
  %v456 = vtanh.pop %v455
  %458 = vrot.lane.b32.xlu0 %v456, 32
  %v459 = vpop.permute.xlu0 %458
  %v461 = vmul.f32 %v443, %v459
  %463 = vrot.lane.b32.xlu0 %v461, 64
  %v464 = vpop.permute.xlu0 %463
  %v465 = vsel %vm163, %v464, 0
  %467 = vmatprep.subr.mxu0 0.0
  %468 = vmatpush1.msra.mxu0 0.0
  %469 = vmatprep.subr.mxu0 0.0
  %470 = vmatpush1.msra.mxu0 0.0
  %471 = vmatprep.subr.mxu0 0.0
  %472 = vmatpush1.msra.mxu0 0.0
  %473 = vmatprep.subr.mxu0 0.0
  %474 = vmatpush1.msra.mxu0 0.0
  %475 = vmatprep.subr.mxu0 0.0
  %476 = vmatpush1.msra.mxu0 0.0
  %477 = vmatprep.subr.mxu0 0.0
  %478 = vmatpush1.msra.mxu0 0.0
  %479 = vmatprep.subr.mxu0 0.0
  %480 = vmatpush1.msra.mxu0 0.0
  %481 = vmatprep.subr.mxu0 0.0
  %482 = vmatpush1.msra.mxu0 0.0
  %483 = vmatprep.subr.mxu0 0.0
  %484 = vmatpush1.msra.mxu0 0.0
  %485 = vmatprep.subr.mxu0 0.0
  %486 = vmatpush1.msra.mxu0 0.0
  %487 = vmatprep.subr.mxu0 0.0
  %488 = vmatpush1.msra.mxu0 0.0
  %489 = vmatprep.subr.mxu0 0.0
  %490 = vmatpush1.msra.mxu0 0.0
  %491 = vmatprep.subr.mxu0 0.0
  %492 = vmatpush1.msra.mxu0 %v42
  %493 = vmatprep.subr.mxu0 0.0
  %494 = vmatpush1.msra.mxu0 %v41
  %495 = vmatprep.subr.mxu0 0.0
  %496 = vmatpush1.msra.mxu0 %v40
  %497 = vmatprep.subr.mxu0 0.0
  %498 = vmatpush1.msra.mxu0 %v39
  %499 = vmatprep.subr.mxu0 0.0
  %500 = vmatpush2.msra.mxu0 0.0
  %501 = vmatprep.subr.mxu0 0.0
  %502 = vmatpush2.msra.mxu0 0.0
  %503 = vmatprep.subr.mxu0 0.0
  %504 = vmatpush2.msra.mxu0 0.0
  %505 = vmatprep.subr.mxu0 0.0
  %506 = vmatpush2.msra.mxu0 0.0
  %507 = vmatprep.subr.mxu0 0.0
  %508 = vmatpush2.msra.mxu0 0.0
  %509 = vmatprep.subr.mxu0 0.0
  %510 = vmatpush2.msra.mxu0 0.0
  %511 = vmatprep.subr.mxu0 0.0
  %512 = vmatpush2.msra.mxu0 0.0
  %513 = vmatprep.subr.mxu0 0.0
  %514 = vmatpush2.msra.mxu0 0.0
  %515 = vmatprep.subr.mxu0 0.0
  %516 = vmatpush2.msra.mxu0 0.0
  %517 = vmatprep.subr.mxu0 0.0
  %518 = vmatpush2.msra.mxu0 0.0
  %519 = vmatprep.subr.mxu0 0.0
  %520 = vmatpush2.msra.mxu0 0.0
  %521 = vmatprep.subr.mxu0 0.0
  %522 = vmatpush2.msra.mxu0 0.0
  %523 = vmatprep.subr.mxu0 0.0
  %524 = vmatpush2.msra.mxu0 0.0
  %525 = vmatprep.subr.mxu0 0.0
  %526 = vmatpush2.msra.mxu0 0.0
  %527 = vmatprep.subr.mxu0 0.0
  %528 = vmatpush2.msra.mxu0 0.0
  %529 = vmatprep.subr.mxu0 0.0
  %530 = vmatpush2.msra.mxu0 0.0
  %531 = vmatprep.mubr.f32.mxu0 0.0
  %532 = vmatmul.mubr.f32.gmra.mxu0 %v465
  %v533 = vpop.f32.mrf.mxu0
  %v534 = vadd.f32 0.0, %v533
  %v535 = vpop.f32.mrf.mxu0
  %536 = vdwg.mxu0
  %v537 = vadd.f32 %v140, %v534
  %v538 = vxor.u32 %v537, 2147483648
  %v539 = vmul.f32 %v538, 1.442695
  %v540 = vpow.pop %v539
  %v541 = vadd.f32 %v540, 1.0
  %v542 = vrcp.pop %v541
  %v543 = vmul.f32 1.0, %v542
  %v544 = vtanh.pop %v537
  %v545 = vmul.f32 %v543, %v455
  %547 = vrot.lane.b32.xlu0 %v544, 32
  %v548 = vpop.permute.xlu0 %547
  %v550 = vmul.f32 %v543, %v548
  %552 = vrot.lane.b32.xlu0 %v550, 32
  %v553 = vpop.permute.xlu0 %552
  %v555 = vadd.f32 %v545, %v553
  %v556 = vtanh.pop %v555
  %558 = vrot.lane.b32.xlu0 %v556, 32
  %v559 = vpop.permute.xlu0 %558
  %v561 = vmul.f32 %v543, %v559
  %563 = vrot.lane.b32.xlu0 %v561, 64
  %v564 = vpop.permute.xlu0 %563
  %v565 = vsel %vm163, %v564, 0
  %567 = vmatprep.subr.mxu0 0.0
  %568 = vmatpush1.msra.mxu0 0.0
  %569 = vmatprep.subr.mxu0 0.0
  %570 = vmatpush1.msra.mxu0 0.0
  %571 = vmatprep.subr.mxu0 0.0
  %572 = vmatpush1.msra.mxu0 0.0
  %573 = vmatprep.subr.mxu0 0.0
  %574 = vmatpush1.msra.mxu0 0.0
  %575 = vmatprep.subr.mxu0 0.0
  %576 = vmatpush1.msra.mxu0 0.0
  %577 = vmatprep.subr.mxu0 0.0
  %578 = vmatpush1.msra.mxu0 0.0
  %579 = vmatprep.subr.mxu0 0.0
  %580 = vmatpush1.msra.mxu0 0.0
  %581 = vmatprep.subr.mxu0 0.0
  %582 = vmatpush1.msra.mxu0 0.0
  %583 = vmatprep.subr.mxu0 0.0
  %584 = vmatpush1.msra.mxu0 0.0
  %585 = vmatprep.subr.mxu0 0.0
  %586 = vmatpush1.msra.mxu0 0.0
  %587 = vmatprep.subr.mxu0 0.0
  %588 = vmatpush1.msra.mxu0 0.0
  %589 = vmatprep.subr.mxu0 0.0
  %590 = vmatpush1.msra.mxu0 0.0
  %591 = vmatprep.subr.mxu0 0.0
  %592 = vmatpush1.msra.mxu0 %v42
  %593 = vmatprep.subr.mxu0 0.0
  %594 = vmatpush1.msra.mxu0 %v41
  %595 = vmatprep.subr.mxu0 0.0
  %596 = vmatpush1.msra.mxu0 %v40
  %597 = vmatprep.subr.mxu0 0.0
  %598 = vmatpush1.msra.mxu0 %v39
  %599 = vmatprep.subr.mxu0 0.0
  %600 = vmatpush2.msra.mxu0 0.0
  %601 = vmatprep.subr.mxu0 0.0
  %602 = vmatpush2.msra.mxu0 0.0
  %603 = vmatprep.subr.mxu0 0.0
  %604 = vmatpush2.msra.mxu0 0.0
  %605 = vmatprep.subr.mxu0 0.0
  %606 = vmatpush2.msra.mxu0 0.0
  %607 = vmatprep.subr.mxu0 0.0
  %608 = vmatpush2.msra.mxu0 0.0
  %609 = vmatprep.subr.mxu0 0.0
  %610 = vmatpush2.msra.mxu0 0.0
  %611 = vmatprep.subr.mxu0 0.0
  %612 = vmatpush2.msra.mxu0 0.0
  %613 = vmatprep.subr.mxu0 0.0
  %614 = vmatpush2.msra.mxu0 0.0
  %615 = vmatprep.subr.mxu0 0.0
  %616 = vmatpush2.msra.mxu0 0.0
  %617 = vmatprep.subr.mxu0 0.0
  %618 = vmatpush2.msra.mxu0 0.0
  %619 = vmatprep.subr.mxu0 0.0
  %620 = vmatpush2.msra.mxu0 0.0
  %621 = vmatprep.subr.mxu0 0.0
  %622 = vmatpush2.msra.mxu0 0.0
  %623 = vmatprep.subr.mxu0 0.0
  %624 = vmatpush2.msra.mxu0 0.0
  %625 = vmatprep.subr.mxu0 0.0
  %626 = vmatpush2.msra.mxu0 0.0
  %627 = vmatprep.subr.mxu0 0.0
  %628 = vmatpush2.msra.mxu0 0.0
  %629 = vmatprep.subr.mxu0 0.0
  %630 = vmatpush2.msra.mxu0 0.0
  %631 = vmatprep.mubr.f32.mxu0 0.0
  %632 = vmatmul.mubr.f32.gmra.mxu0 %v565
  %v633 = vpop.f32.mrf.mxu0
  %v634 = vadd.f32 0.0, %v633
  %v635 = vpop.f32.mrf.mxu0
  %636 = vdwg.mxu0
  %v637 = vadd.f32 %v145, %v634
  %v638 = vxor.u32 %v637, 2147483648
  %v639 = vmul.f32 %v638, 1.442695
  %v640 = vpow.pop %v639
  %v641 = vadd.f32 %v640, 1.0
  %v642 = vrcp.pop %v641
  %v643 = vmul.f32 1.0, %v642
  %v644 = vtanh.pop %v637
  %v645 = vmul.f32 %v643, %v555
  %647 = vrot.lane.b32.xlu0 %v644, 32
  %v648 = vpop.permute.xlu0 %647
  %v650 = vmul.f32 %v643, %v648
  %652 = vrot.lane.b32.xlu0 %v650, 32
  %v653 = vpop.permute.xlu0 %652
  %v655 = vadd.f32 %v645, %v653
  %v656 = vtanh.pop %v655
  %658 = vrot.lane.b32.xlu0 %v656, 32
  %v659 = vpop.permute.xlu0 %658
  %v661 = vmul.f32 %v643, %v659
  %663 = vrot.lane.b32.xlu0 %v661, 64
  %v664 = vpop.permute.xlu0 %663
  %v665 = vsel %vm163, %v664, 0
  %667 = vmatprep.subr.mxu0 0.0
  %668 = vmatpush1.msra.mxu0 0.0
  %669 = vmatprep.subr.mxu0 0.0
  %670 = vmatpush1.msra.mxu0 0.0
  %671 = vmatprep.subr.mxu0 0.0
  %672 = vmatpush1.msra.mxu0 0.0
  %673 = vmatprep.subr.mxu0 0.0
  %674 = vmatpush1.msra.mxu0 0.0
  %675 = vmatprep.subr.mxu0 0.0
  %676 = vmatpush1.msra.mxu0 0.0
  %677 = vmatprep.subr.mxu0 0.0
  %678 = vmatpush1.msra.mxu0 0.0
  %679 = vmatprep.subr.mxu0 0.0
  %680 = vmatpush1.msra.mxu0 0.0
  %681 = vmatprep.subr.mxu0 0.0
  %682 = vmatpush1.msra.mxu0 0.0
  %683 = vmatprep.subr.mxu0 0.0
  %684 = vmatpush1.msra.mxu0 0.0
  %685 = vmatprep.subr.mxu0 0.0
  %686 = vmatpush1.msra.mxu0 0.0
  %687 = vmatprep.subr.mxu0 0.0
  %688 = vmatpush1.msra.mxu0 0.0
  %689 = vmatprep.subr.mxu0 0.0
  %690 = vmatpush1.msra.mxu0 0.0
  %691 = vmatprep.subr.mxu0 0.0
  %692 = vmatpush1.msra.mxu0 %v42
  %693 = vmatprep.subr.mxu0 0.0
  %694 = vmatpush1.msra.mxu0 %v41
  %695 = vmatprep.subr.mxu0 0.0
  %696 = vmatpush1.msra.mxu0 %v40
  %697 = vmatprep.subr.mxu0 0.0
  %698 = vmatpush1.msra.mxu0 %v39
  %699 = vmatprep.subr.mxu0 0.0
  %700 = vmatpush2.msra.mxu0 0.0
  %701 = vmatprep.subr.mxu0 0.0
  %702 = vmatpush2.msra.mxu0 0.0
  %703 = vmatprep.subr.mxu0 0.0
  %704 = vmatpush2.msra.mxu0 0.0
  %705 = vmatprep.subr.mxu0 0.0
  %706 = vmatpush2.msra.mxu0 0.0
  %707 = vmatprep.subr.mxu0 0.0
  %708 = vmatpush2.msra.mxu0 0.0
  %709 = vmatprep.subr.mxu0 0.0
  %710 = vmatpush2.msra.mxu0 0.0
  %711 = vmatprep.subr.mxu0 0.0
  %712 = vmatpush2.msra.mxu0 0.0
  %713 = vmatprep.subr.mxu0 0.0
  %714 = vmatpush2.msra.mxu0 0.0
  %715 = vmatprep.subr.mxu0 0.0
  %716 = vmatpush2.msra.mxu0 0.0
  %717 = vmatprep.subr.mxu0 0.0
  %718 = vmatpush2.msra.mxu0 0.0
  %719 = vmatprep.subr.mxu0 0.0
  %720 = vmatpush2.msra.mxu0 0.0
  %721 = vmatprep.subr.mxu0 0.0
  %722 = vmatpush2.msra.mxu0 0.0
  %723 = vmatprep.subr.mxu0 0.0
  %724 = vmatpush2.msra.mxu0 0.0
  %725 = vmatprep.subr.mxu0 0.0
  %726 = vmatpush2.msra.mxu0 0.0
  %727 = vmatprep.subr.mxu0 0.0
  %728 = vmatpush2.msra.mxu0 0.0
  %729 = vmatprep.subr.mxu0 0.0
  %730 = vmatpush2.msra.mxu0 0.0
  %731 = vmatprep.mubr.f32.mxu0 0.0
  %732 = vmatmul.mubr.f32.gmra.mxu0 %v665
  %v733 = vpop.f32.mrf.mxu0
  %v734 = vadd.f32 0.0, %v733
  %v735 = vpop.f32.mrf.mxu0
  %736 = vdwg.mxu0
  %v737 = vadd.f32 %v150, %v734
  %v738 = vxor.u32 %v737, 2147483648
  %v739 = vmul.f32 %v738, 1.442695
  %v740 = vpow.pop %v739
  %v741 = vadd.f32 %v740, 1.0
  %v742 = vrcp.pop %v741
  %v743 = vmul.f32 1.0, %v742
  %v744 = vtanh.pop %v737
  %v745 = vmul.f32 %v743, %v655
  %747 = vrot.lane.b32.xlu0 %v744, 32
  %v748 = vpop.permute.xlu0 %747
  %v750 = vmul.f32 %v743, %v748
  %752 = vrot.lane.b32.xlu0 %v750, 32
  %v753 = vpop.permute.xlu0 %752
  %v755 = vadd.f32 %v745, %v753
  %v756 = vtanh.pop %v755
  %758 = vrot.lane.b32.xlu0 %v756, 32
  %v759 = vpop.permute.xlu0 %758
  %v761 = vmul.f32 %v743, %v759
  %763 = vrot.lane.b32.xlu0 %v761, 64
  %v764 = vpop.permute.xlu0 %763
  %v765 = vsel %vm163, %v764, 0
  %767 = vmatprep.subr.mxu0 0.0
  %768 = vmatpush1.msra.mxu0 0.0
  %769 = vmatprep.subr.mxu0 0.0
  %770 = vmatpush1.msra.mxu0 0.0
  %771 = vmatprep.subr.mxu0 0.0
  %772 = vmatpush1.msra.mxu0 0.0
  %773 = vmatprep.subr.mxu0 0.0
  %774 = vmatpush1.msra.mxu0 0.0
  %775 = vmatprep.subr.mxu0 0.0
  %776 = vmatpush1.msra.mxu0 0.0
  %777 = vmatprep.subr.mxu0 0.0
  %778 = vmatpush1.msra.mxu0 0.0
  %779 = vmatprep.subr.mxu0 0.0
  %780 = vmatpush1.msra.mxu0 0.0
  %781 = vmatprep.subr.mxu0 0.0
  %782 = vmatpush1.msra.mxu0 0.0
  %783 = vmatprep.subr.mxu0 0.0
  %784 = vmatpush1.msra.mxu0 0.0
  %785 = vmatprep.subr.mxu0 0.0
  %786 = vmatpush1.msra.mxu0 0.0
  %787 = vmatprep.subr.mxu0 0.0
  %788 = vmatpush1.msra.mxu0 0.0
  %789 = vmatprep.subr.mxu0 0.0
  %790 = vmatpush1.msra.mxu0 0.0
  %791 = vmatprep.subr.mxu0 0.0
  %792 = vmatpush1.msra.mxu0 %v42
  %793 = vmatprep.subr.mxu0 0.0
  %794 = vmatpush1.msra.mxu0 %v41
  %795 = vmatprep.subr.mxu0 0.0
  %796 = vmatpush1.msra.mxu0 %v40
  %797 = vmatprep.subr.mxu0 0.0
  %798 = vmatpush1.msra.mxu0 %v39
  %799 = vmatprep.subr.mxu0 0.0
  %800 = vmatpush2.msra.mxu0 0.0
  %801 = vmatprep.subr.mxu0 0.0
  %802 = vmatpush2.msra.mxu0 0.0
  %803 = vmatprep.subr.mxu0 0.0
  %804 = vmatpush2.msra.mxu0 0.0
  %805 = vmatprep.subr.mxu0 0.0
  %806 = vmatpush2.msra.mxu0 0.0
  %807 = vmatprep.subr.mxu0 0.0
  %808 = vmatpush2.msra.mxu0 0.0
  %809 = vmatprep.subr.mxu0 0.0
  %810 = vmatpush2.msra.mxu0 0.0
  %811 = vmatprep.subr.mxu0 0.0
  %812 = vmatpush2.msra.mxu0 0.0
  %813 = vmatprep.subr.mxu0 0.0
  %814 = vmatpush2.msra.mxu0 0.0
  %815 = vmatprep.subr.mxu0 0.0
  %816 = vmatpush2.msra.mxu0 0.0
  %817 = vmatprep.subr.mxu0 0.0
  %818 = vmatpush2.msra.mxu0 0.0
  %819 = vmatprep.subr.mxu0 0.0
  %820 = vmatpush2.msra.mxu0 0.0
  %821 = vmatprep.subr.mxu0 0.0
  %822 = vmatpush2.msra.mxu0 0.0
  %823 = vmatprep.subr.mxu0 0.0
  %824 = vmatpush2.msra.mxu0 0.0
  %825 = vmatprep.subr.mxu0 0.0
  %826 = vmatpush2.msra.mxu0 0.0
  %827 = vmatprep.subr.mxu0 0.0
  %828 = vmatpush2.msra.mxu0 0.0
  %829 = vmatprep.subr.mxu0 0.0
  %830 = vmatpush2.msra.mxu0 0.0
  %831 = vmatprep.mubr.f32.mxu0 0.0
  %832 = vmatmul.mubr.f32.gmra.mxu0 %v765
  %v833 = vpop.f32.mrf.mxu0
  %v834 = vadd.f32 0.0, %v833
  %v835 = vpop.f32.mrf.mxu0
  %836 = vdwg.mxu0
  %v837 = vadd.f32 %v155, %v834
  %v838 = vxor.u32 %v837, 2147483648
  %v839 = vmul.f32 %v838, 1.442695
  %v840 = vpow.pop %v839
  %v841 = vadd.f32 %v840, 1.0
  %v842 = vrcp.pop %v841
  %v843 = vmul.f32 1.0, %v842
  %v844 = vtanh.pop %v837
  %v845 = vmul.f32 %v843, %v755
  %847 = vrot.lane.b32.xlu0 %v844, 32
  %v848 = vpop.permute.xlu0 %847
  %v850 = vmul.f32 %v843, %v848
  %852 = vrot.lane.b32.xlu0 %v850, 32
  %v853 = vpop.permute.xlu0 %852
  %v855 = vadd.f32 %v845, %v853
  %v856 = vtanh.pop %v855
  %858 = vrot.lane.b32.xlu0 %v856, 32
  %v859 = vpop.permute.xlu0 %858
  %v861 = vmul.f32 %v843, %v859
  %863 = vrot.lane.b32.xlu0 %v861, 64
  %v864 = vpop.permute.xlu0 %863
  %v865 = vsel %vm163, %v864, 0
  %867 = vmatprep.subr.mxu0 0.0
  %868 = vmatpush1.msra.mxu0 0.0
  %869 = vmatprep.subr.mxu0 0.0
  %870 = vmatpush1.msra.mxu0 0.0
  %871 = vmatprep.subr.mxu0 0.0
  %872 = vmatpush1.msra.mxu0 0.0
  %873 = vmatprep.subr.mxu0 0.0
  %874 = vmatpush1.msra.mxu0 0.0
  %875 = vmatprep.subr.mxu0 0.0
  %876 = vmatpush1.msra.mxu0 0.0
  %877 = vmatprep.subr.mxu0 0.0
  %878 = vmatpush1.msra.mxu0 0.0
  %879 = vmatprep.subr.mxu0 0.0
  %880 = vmatpush1.msra.mxu0 0.0
  %881 = vmatprep.subr.mxu0 0.0
  %882 = vmatpush1.msra.mxu0 0.0
  %883 = vmatprep.subr.mxu0 0.0
  %884 = vmatpush1.msra.mxu0 0.0
  %885 = vmatprep.subr.mxu0 0.0
  %886 = vmatpush1.msra.mxu0 0.0
  %887 = vmatprep.subr.mxu0 0.0
  %888 = vmatpush1.msra.mxu0 0.0
  %889 = vmatprep.subr.mxu0 0.0
  %890 = vmatpush1.msra.mxu0 0.0
  %891 = vmatprep.subr.mxu0 0.0
  %892 = vmatpush1.msra.mxu0 %v42
  %893 = vmatprep.subr.mxu0 0.0
  %894 = vmatpush1.msra.mxu0 %v41
  %895 = vmatprep.subr.mxu0 0.0
  %896 = vmatpush1.msra.mxu0 %v40
  %897 = vmatprep.subr.mxu0 0.0
  %898 = vmatpush1.msra.mxu0 %v39
  %899 = vmatprep.subr.mxu0 0.0
  %900 = vmatpush2.msra.mxu0 0.0
  %901 = vmatprep.subr.mxu0 0.0
  %902 = vmatpush2.msra.mxu0 0.0
  %903 = vmatprep.subr.mxu0 0.0
  %904 = vmatpush2.msra.mxu0 0.0
  %905 = vmatprep.subr.mxu0 0.0
  %906 = vmatpush2.msra.mxu0 0.0
  %907 = vmatprep.subr.mxu0 0.0
  %908 = vmatpush2.msra.mxu0 0.0
  %909 = vmatprep.subr.mxu0 0.0
  %910 = vmatpush2.msra.mxu0 0.0
  %911 = vmatprep.subr.mxu0 0.0
  %912 = vmatpush2.msra.mxu0 0.0
  %913 = vmatprep.subr.mxu0 0.0
  %914 = vmatpush2.msra.mxu0 0.0
  %915 = vmatprep.subr.mxu0 0.0
  %916 = vmatpush2.msra.mxu0 0.0
  %917 = vmatprep.subr.mxu0 0.0
  %918 = vmatpush2.msra.mxu0 0.0
  %919 = vmatprep.subr.mxu0 0.0
  %920 = vmatpush2.msra.mxu0 0.0
  %921 = vmatprep.subr.mxu0 0.0
  %922 = vmatpush2.msra.mxu0 0.0
  %923 = vmatprep.subr.mxu0 0.0
  %924 = vmatpush2.msra.mxu0 0.0
  %925 = vmatprep.subr.mxu0 0.0
  %926 = vmatpush2.msra.mxu0 0.0
  %927 = vmatprep.subr.mxu0 0.0
  %928 = vmatpush2.msra.mxu0 0.0
  %929 = vmatprep.subr.mxu0 0.0
  %930 = vmatpush2.msra.mxu0 0.0
  %931 = vmatprep.mubr.f32.mxu0 0.0
  %932 = vmatmul.mubr.f32.gmra.mxu0 %v865
  %v933 = vpop.f32.mrf.mxu0
  %v934 = vadd.f32 0.0, %v933
  %v935 = vpop.f32.mrf.mxu0
  %936 = vdwg.mxu0
  %v937 = vadd.f32 %v160, %v934
  %v938 = vxor.u32 %v937, 2147483648
  %v939 = vmul.f32 %v938, 1.442695
  %v940 = vpow.pop %v939
  %v941 = vadd.f32 %v940, 1.0
  %v942 = vrcp.pop %v941
  %v943 = vmul.f32 1.0, %v942
  %v944 = vtanh.pop %v937
  %v945 = vmul.f32 %v943, %v855
  %947 = vrot.lane.b32.xlu0 %v944, 32
  %v948 = vpop.permute.xlu0 %947
  %v950 = vmul.f32 %v943, %v948
  %952 = vrot.lane.b32.xlu0 %v950, 32
  %v953 = vpop.permute.xlu0 %952
  %v955 = vadd.f32 %v945, %v953
  %v956 = vtanh.pop %v955
  %958 = vrot.lane.b32.xlu0 %v956, 32
  %v959 = vpop.permute.xlu0 %958
  %v961 = vmul.f32 %v943, %v959
  %v962 = vld [vmem:[%s4] sm:$0xff]
  %v963 = vld [vmem:[%s4 + $0x8] sm:$0xff]
  %v964 = vld [vmem:[%s4 + $0x10] sm:$0xff]
  %v965 = vld [vmem:[%s4 + $0x18] sm:$0xff]
  %v966 = vld [vmem:[%s5] sm:$0x1]
  %v968 = vlaneseq
  %v969 = vshrl.u32 %v968, 7
  %v970 = vsub.s32 0, %v969
  %v971 = vrot.slane %v966, %v970
  %974 = vrot.lane.b32.xlu0 %v961, 64
  %v975 = vpop.permute.xlu0 %974
  %v976 = vsel %vm163, %v975, 0
  %978 = vmatprep.subr.mxu0 0.0
  %979 = vmatpush1.msra.mxu0 0.0
  %980 = vmatprep.subr.mxu0 0.0
  %981 = vmatpush1.msra.mxu0 0.0
  %982 = vmatprep.subr.mxu0 0.0
  %983 = vmatpush1.msra.mxu0 0.0
  %984 = vmatprep.subr.mxu0 0.0
  %985 = vmatpush1.msra.mxu0 0.0
  %986 = vmatprep.subr.mxu0 0.0
  %987 = vmatpush1.msra.mxu0 0.0
  %988 = vmatprep.subr.mxu0 0.0
  %989 = vmatpush1.msra.mxu0 0.0
  %990 = vmatprep.subr.mxu0 0.0
  %991 = vmatpush1.msra.mxu0 0.0
  %992 = vmatprep.subr.mxu0 0.0
  %993 = vmatpush1.msra.mxu0 0.0
  %994 = vmatprep.subr.mxu0 0.0
  %995 = vmatpush1.msra.mxu0 0.0
  %996 = vmatprep.subr.mxu0 0.0
  %997 = vmatpush1.msra.mxu0 0.0
  %998 = vmatprep.subr.mxu0 0.0
  %999 = vmatpush1.msra.mxu0 0.0
  %1000 = vmatprep.subr.mxu0 0.0
  %1001 = vmatpush1.msra.mxu0 0.0
  %1002 = vmatprep.subr.mxu0 0.0
  %1003 = vmatpush1.msra.mxu0 %v965
  %1004 = vmatprep.subr.mxu0 0.0
  %1005 = vmatpush1.msra.mxu0 %v964
  %1006 = vmatprep.subr.mxu0 0.0
  %1007 = vmatpush1.msra.mxu0 %v963
  %1008 = vmatprep.subr.mxu0 0.0
  %1009 = vmatpush1.msra.mxu0 %v962
  %1010 = vmatprep.subr.mxu0 0.0
  %1011 = vmatpush2.msra.mxu0 0.0
  %1012 = vmatprep.subr.mxu0 0.0
  %1013 = vmatpush2.msra.mxu0 0.0
  %1014 = vmatprep.subr.mxu0 0.0
  %1015 = vmatpush2.msra.mxu0 0.0
  %1016 = vmatprep.subr.mxu0 0.0
  %1017 = vmatpush2.msra.mxu0 0.0
  %1018 = vmatprep.subr.mxu0 0.0
  %1019 = vmatpush2.msra.mxu0 0.0
  %1020 = vmatprep.subr.mxu0 0.0
  %1021 = vmatpush2.msra.mxu0 0.0
  %1022 = vmatprep.subr.mxu0 0.0
  %1023 = vmatpush2.msra.mxu0 0.0
  %1024 = vmatprep.subr.mxu0 0.0
  %1025 = vmatpush2.msra.mxu0 0.0
  %1026 = vmatprep.subr.mxu0 0.0
  %1027 = vmatpush2.msra.mxu0 0.0
  %1028 = vmatprep.subr.mxu0 0.0
  %1029 = vmatpush2.msra.mxu0 0.0
  %1030 = vmatprep.subr.mxu0 0.0
  %1031 = vmatpush2.msra.mxu0 0.0
  %1032 = vmatprep.subr.mxu0 0.0
  %1033 = vmatpush2.msra.mxu0 0.0
  %1034 = vmatprep.subr.mxu0 0.0
  %1035 = vmatpush2.msra.mxu0 0.0
  %1036 = vmatprep.subr.mxu0 0.0
  %1037 = vmatpush2.msra.mxu0 0.0
  %1038 = vmatprep.subr.mxu0 0.0
  %1039 = vmatpush2.msra.mxu0 0.0
  %1040 = vmatprep.subr.mxu0 0.0
  %1041 = vmatpush2.msra.mxu0 0.0
  %1042 = vmatprep.mubr.f32.mxu0 0.0
  %1043 = vmatmul.mubr.f32.gmra.mxu0 %v976
  %v1044 = vpop.f32.mrf.mxu0
  %v1045 = vadd.f32 %v971, %v1044
  %v1046 = vpop.f32.mrf.mxu0
  %1047 = vdwg.mxu0
  %v1048 = vmax.f32 %v1045, 0.0
  %1049 = vst [vmem:[%s6] sm:$0xff] %v1048
  // Predicated region
  $region26: #{document_context_encoder.1} parent=0 // pred_check
    _
  $region27: #{document_context_encoder.1} parent=0 // pred_check_branch
    %1051 = sbr.rel (0) target = $region29
  $region28: #{document_context_encoder.1} parent=0 // pred_region
    _
  $region29: #{document_context_encoder.1} parent=0 // pred_fallthru
    _
  // Predicated region
  $region30: #{document_context_encoder.1} parent=0 // pred_check
    _
  $region31: #{document_context_encoder.1} parent=0 // pred_check_branch
    %1053 = sbr.rel (0) target = $region33
  $region32: #{document_context_encoder.1} parent=0 // pred_region
    _
  $region33: #{document_context_encoder.1} parent=0 // pred_fallthru
    _

</llo_original>
